<compile_context>
chip_gen: v7x
topology: tpu7x:2x2x1
jax: 0.10.0
libtpu: 0.0.40
codegen_flags: <defaults>
</compile_context>

<pallas_src>
import functools
import math

import jax
import jax.numpy as jnp
from jax.experimental import pallas as pl
from jax.experimental.pallas import tpu as pltpu


def _round_up(a, b):
    return (a + b - 1) // b * b


# -----------------------------------------------------------------------------
# pltpu.roll convention probe (one tiny kernel, cached).  pltpu.roll follows
# jnp.roll semantics; verify the sublane-roll sign once on the real backend so
# the static shifts used below always shift content toward *lower* indices.
# (Call this outside jit; the result is cached module-wide.)
# -----------------------------------------------------------------------------
_ROLL_LIKE_NUMPY = None


def _roll_like_numpy():
    global _ROLL_LIKE_NUMPY
    if _ROLL_LIKE_NUMPY is None:
        def probe(x_ref, o_ref):
            o_ref[...] = pltpu.roll(x_ref[...], shift=1, axis=0)

        x = jnp.arange(8 * 128, dtype=jnp.float32).reshape(8, 128)
        got = pl.pallas_call(
            probe, out_shape=jax.ShapeDtypeStruct((8, 128), jnp.float32))(x)
        _ROLL_LIKE_NUMPY = bool(jnp.array_equal(got, jnp.roll(x, 1, axis=0)))
    return _ROLL_LIKE_NUMPY


def _lookahead_kernel(x_ref, halo_ref, w_ref, o_ref, *, stripe, numpy_roll):
    # x_ref:    (tile_seq, tile_lane)  current sequence block (lane-dense)
    # halo_ref: (ctx_p,    tile_lane)  the ctx_p rows following this block
    # w_ref:    (ctx1,     tile_lane)  per-lane weights, one row per tap
    # o_ref:    (tile_seq, tile_lane)
    tile_seq = x_ref.shape[0]
    ctx_p = halo_ref.shape[0]
    ctx1 = w_ref.shape[0]
    n_stripes = tile_seq // stripe
    win_rows = stripe + ctx_p

    w = w_ref[...].astype(jnp.float32)              # (ctx1, lane), lane-dense

    # Static (unrolled) loop over register-sized row stripes; every sublane
    # start/size below is a multiple of 8, so no unaligned-slice VMEM copies.
    for s in range(n_stripes):
        r0 = s * stripe
        if s + 1 < n_stripes:
            # Lookahead window fully inside this block.
            win = x_ref[r0:r0 + win_rows, :]
        else:
            # Last stripe of the block: lookahead rows come from the halo
            # (next block's leading rows, or the zero tail for the last block).
            win = jnp.concatenate(
                [x_ref[r0:r0 + stripe, :], halo_ref[...]], axis=0)

        acc = win[:stripe, :].astype(jnp.float32) * w[0, :]
        for c in range(1, ctx1):
            # shifted[t] = win[t + c] for t < stripe (cyclic roll on the XLU;
            # the rows we keep never wrap because stripe + context <= win_rows).
            shift = (win_rows - c) if numpy_roll else c
            shifted = pltpu.roll(win, shift=shift, axis=0)
            acc = acc + shifted[:stripe, :].astype(jnp.float32) * w[c, :]

        o_ref[r0:r0 + stripe, :] = acc.astype(o_ref.dtype)


def lookahead_convolution(x, weight, context, *, target_block_rows=1024,
                          target_block_lanes=256, target_stripe_rows=64):
    """x: (seq, batch, feature); weight: (feature, context+1) -> (seq, batch, feature)."""
    assert context > 0, "Context should be greater than 0"
    seq, batch, feat = x.shape
    ctx1 = context + 1
    assert weight.shape == (feat, ctx1)
    lanes_logical = batch * feat

    # ---- static tiling parameters (all sublane / lane aligned) -------------
    ctx_p = _round_up(context, 8)                              # halo rows
    stripe = min(ctx_p * max(1, target_stripe_rows // ctx_p),  # rows / stripe
                 _round_up(seq, ctx_p))
    tile_seq = stripe * max(1, min(target_block_rows // stripe,
                                   -(-seq // stripe)))         # rows / block
    seq_p = _round_up(seq, tile_seq)

    tile_lane = min(_round_up(target_block_lanes, 128),
                    _round_up(lanes_logical, 128))              # lanes / block
    n_lanes = _round_up(lanes_logical, tile_lane)

    # ---- lane-dense slab: (seq, batch*feat); zero tail + zero lane pad -----
    # reshape is contiguous (free); a single pad provides both the PyTorch
    # zero-tail and block/lane alignment.  No HBM transposes anywhere.
    x2 = x.reshape(seq, lanes_logical)
    x_pad = jnp.pad(
        x2, ((0, seq_p + ctx_p - seq), (0, n_lanes - lanes_logical)))

    # Weight -> (ctx1, batch*feat): one lane-aligned row per tap, tiled over
    # batch so lane l = b*feat + f carries weight[f, c].
    w_rows = jnp.broadcast_to(weight.T[:, None, :], (ctx1, batch, feat))
    w_rows = w_rows.reshape(ctx1, lanes_logical)
    w_pad = jnp.pad(w_rows, ((0, 0), (0, n_lanes - lanes_logical)))

    n_seq_blocks = seq_p // tile_seq
    n_lane_blocks = n_lanes // tile_lane
    halo_stride = tile_seq // ctx_p    # halo block index advance per seq block

    kernel = functools.partial(_lookahead_kernel, stripe=stripe,
                               numpy_roll=_roll_like_numpy())

    out_pad = pl.pallas_call(
        kernel,
        out_shape=jax.ShapeDtypeStruct((seq_p, n_lanes), x.dtype),
        grid=(n_seq_blocks, n_lane_blocks),
        in_specs=[
            # main sequence block
            pl.BlockSpec((tile_seq, tile_lane), lambda i, j: (i, j)),
            # halo: the ctx_p rows immediately after this block (same array)
            pl.BlockSpec((ctx_p, tile_lane),
                         lambda i, j: ((i + 1) * halo_stride, j)),
            # per-tap, per-lane weights
            pl.BlockSpec((ctx1, tile_lane), lambda i, j: (0, j)),
        ],
        out_specs=pl.BlockSpec((tile_seq, tile_lane), lambda i, j: (i, j)),
        compiler_params=pltpu.CompilerParams(
            dimension_semantics=("parallel", "parallel"),
            vmem_limit_bytes=32 * 1024 * 1024),
    )(x_pad, x_pad, w_pad)

    return out_pad[:seq, :lanes_logical].reshape(seq, batch, feat)


def _reference(x, weight, context):
    """Pure-JAX reference matching the PyTorch forward exactly."""
    seq = x.shape[0]
    xp = jnp.pad(x, ((0, context), (0, 0), (0, 0)))
    windows = jnp.stack([xp[i:i + context + 1] for i in range(seq)])  # (s,c+1,b,f)
    windows = jnp.transpose(windows, (0, 2, 3, 1))                    # (s,b,f,c+1)
    return jnp.sum(windows * weight, axis=3)


if __name__ == "__main__":
    key = jax.random.PRNGKey(0)

    # Config 1: small shapes exercising multiple sequence blocks, multiple
    #           stripes per block, the cross-block halo, the zero tail and
    #           lane padding (batch*feat = 64 -> 128 lanes).
    # Config 2: default tiling (single block / single stripe) with a feature
    #           width spanning two 128-lane blocks.
    configs = [
        dict(seq=40, batch=2, feat=32, context=3,
             tiles=dict(target_block_rows=16, target_block_lanes=128,
                        target_stripe_rows=8)),
        dict(seq=8, batch=2, feat=160, context=3, tiles={}),
    ]

    for cfg in configs:
        key, kx, kw = jax.random.split(key, 3)
        seq, batch, feat, context = (cfg["seq"], cfg["batch"],
                                     cfg["feat"], cfg["context"])
        x = jax.random.normal(kx, (seq, batch, feat), dtype=jnp.float32)

        # Deterministic init mirroring nn.Parameter.uniform_(-stdv, stdv).
        stdv = 1.0 / math.sqrt(context + 1)
        weight = jax.random.uniform(kw, (feat, context + 1), dtype=jnp.float32,
                                    minval=-stdv, maxval=stdv)

        out = lookahead_convolution(x, weight, context, **cfg["tiles"])
        out = jax.block_until_ready(out)

        ref = _reference(x, weight, context)
        assert out.shape == (seq, batch, feat)
        assert jnp.allclose(out, ref, atol=1e-5, rtol=1e-5), cfg

    print("KERNEL_OK")
</pallas_src>

<mosaic_0001>
module attributes {stable_mosaic.version = 11 : i64} {
  func.func @probe(%arg0: memref<8x128xf32, #tpu.memory_space<vmem>>, %arg1: memref<8x128xf32, #tpu.memory_space<vmem>>) attributes {dimension_semantics = [], scalar_prefetch = 0 : i64, scratch_operands = 0 : i64, tpu.core_type = #tpu.core_type<tc>} {
    %c0 = arith.constant 0 : index
    %c0_0 = arith.constant 0 : index
    %0 = vector.load %arg0[%c0, %c0_0] : memref<8x128xf32, #tpu.memory_space<vmem>>, vector<8x128xf32>
    %c1_i32 = arith.constant 1 : i32
    %1 = tpu.dynamic_rotate %0 by %c1_i32 dim 0 : vector<8x128xf32>, i32 -> vector<8x128xf32>
    %c0_1 = arith.constant 0 : index
    %c0_2 = arith.constant 0 : index
    %2 = vector.load %arg1[%c0_1, %c0_2] : memref<8x128xf32, #tpu.memory_space<vmem>>, vector<8x128xf32>
    tpu.vector_store %arg1[%c0_1, %c0_2], %1 {strides = array<i32>} : memref<8x128xf32, #tpu.memory_space<vmem>>, vector<8x128xf32>,
    return
  }
}

</mosaic_0001>

<llo_original>
// kernel: tpu_custom_call.1
$region0: #{tpu_custom_call.1}
  #allocation0 [shape = 'u32[]', space=smem, size = 0x4, offset = 0x4, fixed_abs, tag = 'smem constant byte address 0x4 - core index']
  #allocation1 [shape = 'u32[144,128]{1,0:T(1,128)}', space=vmem, size = 0x12000, scoped, tag = 'internal scratch']
  %s0 = inlined_call_operand.hbm [shape: f32[8,128], index: 0, kind: input, shape index: {}]
  %s1 = inlined_call_operand.hbm [shape: f32[8,128], index: 1, kind: output, shape index: {}]
  %s2 = sld [smem:[#allocation0]]
  $region18: #{tpu_custom_call.1} parent=0
    _
  %s4 = ssub.s32 1, %s2
  %s5 = scalar_select 0, %s4, %s2
  $region1: #{tpu_custom_call.1} parent=0
    #allocation2 [shape = 'u8[4096]{0}', space=vmem, size = 0x1000, scoped, tag = 'input window, operand 0, single buffered']
    #allocation3 [shape = 's32[1]{0}', space=sflag, size = 0x4, scoped, tag = 'scoped memory for tpu_custom_call.1']
    #allocation4 [shape = 's32[1]{0}', space=sflag, size = 0x4, scoped, tag = 'scoped memory for tpu_custom_call.1']
    #allocation5 [shape = 'u8[4096]{0}', space=vmem, size = 0x1000, scoped, tag = 'output window, operand 0, single buffered']
    %6 = vsyncpa [#allocation3], 0
    %7 = vsyncpa [#allocation4], 0
    // Predicated region
    $region2: #{tpu_custom_call.1} parent=1 // pred_check
      _
    $region3: #{tpu_custom_call.1} parent=1 // pred_check_branch
      %9 = sbr.rel (0) target = $region5
    $region4: #{tpu_custom_call.1} parent=1 // pred_region
      %s11 = ssub.s32 128, 128
      %12 = vsyncadd [#allocation3], %s11
      %s14 = sshll.u32 [#allocation2], 4
      %s15 = int_to_ptr.vmem [resolvable:$true] %s14
      %17 = dma.hbm_to_vmem [thread:$0]  %s0, 128, %s15, [#allocation3]
    $region5: #{tpu_custom_call.1} parent=1 // pred_fallthru
      _
    // Predicated region
    $region6: #{tpu_custom_call.1} parent=1 // pred_check
      _
    $region7: #{tpu_custom_call.1} parent=1 // pred_check_branch
      %19 = sbr.rel (0) target = $region9
    $region8: #{tpu_custom_call.1} parent=1 // pred_region
      %20 = dma.done [#allocation3], 128
    $region9: #{tpu_custom_call.1} parent=1 // pred_fallthru
      _
    %v21 = vld [vmem:[#allocation2] sm:$0xff]
    %v22 = vrot.slane %v21, 7
    %23 = vst [vmem:[#allocation5] sm:$0xff] %v22
    // Predicated region
    $region10: #{tpu_custom_call.1} parent=1 // pred_check
      _
    $region11: #{tpu_custom_call.1} parent=1 // pred_check_branch
      %25 = sbr.rel (0) target = $region13
    $region12: #{tpu_custom_call.1} parent=1 // pred_region
      %s27 = ssub.s32 128, 128
      %28 = vsyncadd [#allocation4], %s27
      %s30 = sshll.u32 [#allocation5], 4
      %s31 = int_to_ptr.vmem [resolvable:$true] %s30
      %33 = dma.vmem_to_hbm [thread:$0]  %s31, 128, %s1, [#allocation4]
    $region13: #{tpu_custom_call.1} parent=1 // pred_fallthru
      _
    // Predicated region
    $region14: #{tpu_custom_call.1} parent=1 // pred_check
      _
    $region15: #{tpu_custom_call.1} parent=1 // pred_check_branch
      %35 = sbr.rel (0) target = $region17
    $region16: #{tpu_custom_call.1} parent=1 // pred_region
      %36 = dma.done [#allocation4], 128
    $region17: #{tpu_custom_call.1} parent=1 // pred_fallthru
      _
    %37 = vsyncpa [#allocation3], 1
    %38 = vsyncpa [#allocation4], 1

</llo_original>
